<compile_context>
chip_gen: v7x
topology: tpu7x:2x2x1
jax: 0.10.0
libtpu: 0.0.40
codegen_flags: <defaults>
</compile_context>

<pallas_src>
import functools

import jax
import jax.numpy as jnp
from jax import lax
from jax.experimental import pallas as pl
from jax.experimental.pallas import tpu as pltpu

BN_EPS = 1e-5


# ----------------------------------------------------------------------------- kernel
def _ternary_matmul_kernel(xn_ref, wt_ref, bias_ref, o_ref, *, tile_k):
    # xn_ref  : (B, In)             bf16  normalized input, fully resident (constant index map)
    # wt_ref  : (tile_k, tile_out)  int8  pre-ternarized, pre-transposed weight tile ({-1, +1})
    # bias_ref: (1, tile_out)       f32
    # o_ref   : (B, tile_out)       f32   resident across the K grid axis (acts as accumulator)
    k = pl.program_id(1)

    @pl.when(k == 0)
    def _init():
        o_ref[...] = jnp.broadcast_to(bias_ref[...], o_ref.shape)

    start = pl.multiple_of(k * tile_k, tile_k)
    x_tile = xn_ref[:, pl.ds(start, tile_k)]

    # {-1,+1} is exact in bf16: cast on the VPU, matmul on the bf16 MXU with f32 accumulation.
    # TODO(synk): if the int8->bf16 convert becomes the binding unit on v7x, chunk convert+dot
    # over tile_k/256 sub-slices in an unrolled fori_loop so the bf16 stays in vregs.
    w_bf16 = wt_ref[...].astype(jnp.bfloat16)

    o_ref[...] += lax.dot_general(
        x_tile, w_bf16,
        dimension_numbers=(((1,), (0,)), ((), ())),   # (B, tk) x (tk, to) -> (B, to)
        preferred_element_type=jnp.float32,
    )


# ----------------------------------------------------------------------- hardware / tiling
def _tpu_vmem_capacity_bytes():
    try:
        return int(pltpu.get_tpu_info().vmem_capacity_bytes)
    except Exception:
        return 64 * 2**20   # conservative fallback (v7x per-TensorCore VMEM)


def _tpu_num_tensorcores():
    try:
        info = pltpu.get_tpu_info()
        for attr in ("num_cores", "core_count", "tensorcore_count", "num_tensorcores"):
            v = getattr(info, attr, None)
            if v:
                return int(v)
    except Exception:
        pass
    try:
        return max(1, int(getattr(jax.devices()[0], "num_cores", 1) or 1))
    except Exception:
        return 1


def _vmem_usage_bytes(B, In, tile_k, tile_out):
    return (
        2 * B * In * 2                 # resident bf16 x_norm (conservatively counted x2)
        + 2 * tile_k * tile_out * 1    # int8 weight tile, double-buffered pipeline
        + tile_k * tile_out * 2        # bf16 convert intermediate (may materialize in VMEM)
        + 2 * tile_out * 4             # bias tile
        + 2 * B * tile_out * 4         # resident f32 output / accumulator
    )


def _select_tiles(B, In, Out, vmem_budget, num_cores):
    k_cands = [c for c in (4096, 2048, 1024, 512, 256, 128) if In % c == 0] or [In]
    o_cands = [c for c in (4096, 2048, 1024, 512, 256, 128) if Out % c == 0] or [Out]
    tile_k, tile_out = k_cands[-1], o_cands[-1]
    found = False
    for to in o_cands:                       # prefer the biggest tiles that fit the VMEM budget
        for tk in k_cands:
            if _vmem_usage_bytes(B, In, tk, to) <= vmem_budget:
                tile_k, tile_out, found = tk, to, True
                break
        if found:
            break
    # Megacore split only when the chip really has >= 2 TensorCores (v7x); keep >= 2 parallel
    # grid steps per core so the weight double-buffer stays full on both cores. v5e/v6e (1 TC)
    # keep the largest tile.
    if num_cores >= 2:
        while (Out // tile_out) < 2 * num_cores and tile_out > 128 and (tile_out // 2) % 128 == 0:
            tile_out //= 2
    return tile_k, tile_out


# ----------------------------------------------------------------------------- wrappers
def prepare_ternary_weights(weight, alpha, bias):
    """One-time (per weight-update) prep: ternarize, transpose to int8 (In, Out), reshape bias.

    Hoisted out of the forward path: re-deriving w_t from the f32 weight every call moves ~5x
    the kernel's own weight traffic in this HBM-bound GEMV-like regime.
    """
    d = weight.astype(jnp.float32) - alpha.astype(jnp.float32)[None, :]
    # Reference: where(d > 0, 1, where(d < 1, -1, 0)); the inner 0-branch is dead (d <= 0 => d < 1).
    w_t = jnp.where(d > 0, jnp.int8(1), jnp.int8(-1))
    w_t_T = jnp.asarray(w_t.T)                         # (In, Out): natural MXU (M,K)x(K,N) layout
    bias2 = bias.astype(jnp.float32).reshape(1, -1)    # (1, Out)
    return w_t_T, bias2


def ternary_linear_forward(x, w_t_T, bias2, *, tile_out=None, tile_k=None):
    """out = BatchNorm1d(x) @ w_ternary.T + bias, with w pre-ternarized/transposed int8 (In, Out)."""
    B, In = x.shape
    In_w, Out = w_t_T.shape
    assert In == In_w, "weight / input feature mismatch"
    assert In % 128 == 0 and Out % 128 == 0, "in/out features must be multiples of 128"

    # ---- BatchNorm1d (training-mode batch statistics) hoisted out of the kernel ----
    # (grid-invariant: doing it in-kernel would redo the reductions once per output tile)
    xf = x.astype(jnp.float32)
    mean = jnp.mean(xf, axis=0, keepdims=True)
    var = jnp.mean((xf - mean) ** 2, axis=0, keepdims=True)           # biased variance
    x_norm = ((xf - mean) * lax.rsqrt(var + BN_EPS)).astype(jnp.bfloat16)

    # ---- Generation-aware tiling, budgeted against the chip's actual VMEM ----
    vmem_cap = _tpu_vmem_capacity_bytes()
    vmem_budget = vmem_cap * 3 // 4          # headroom for compiler scratch
    num_cores = _tpu_num_tensorcores()
    auto_k, auto_out = _select_tiles(B, In, Out, vmem_budget, num_cores)
    tile_k = tile_k or auto_k
    tile_out = tile_out or auto_out
    assert In % tile_k == 0 and Out % tile_out == 0

    usage = _vmem_usage_bytes(B, In, tile_k, tile_out)
    # TODO(synk): for training-sized B add a batch grid axis; the resident x_norm / output
    # blocks here scale with B and are sized for GEMV-like batches.
    assert usage <= vmem_budget, "batch too large for resident-x tiling; add a B grid axis"

    grid = (Out // tile_out, In // tile_k)
    vmem_limit = int(min(vmem_budget, max(32 * 2**20, 4 * usage)))

    cost = pl.CostEstimate(
        flops=2 * B * Out * In,
        transcendentals=0,
        bytes_accessed=Out * In + 2 * B * In + 4 * B * Out + 4 * Out,
    )

    kernel = functools.partial(_ternary_matmul_kernel, tile_k=tile_k)

    return pl.pallas_call(
        kernel,
        out_shape=jax.ShapeDtypeStruct((B, Out), jnp.float32),
        grid_spec=pltpu.PrefetchScalarGridSpec(
            num_scalar_prefetch=0,
            grid=grid,
            in_specs=[
                pl.BlockSpec((B, In), lambda j, k: (0, 0)),             # x_norm: fully resident
                pl.BlockSpec((tile_k, tile_out), lambda j, k: (k, j)),  # int8 weight (In, Out)
                pl.BlockSpec((1, tile_out), lambda j, k: (0, j)),       # bias tile
            ],
            out_specs=pl.BlockSpec((B, tile_out), lambda j, k: (0, j)),  # resident across K
        ),
        compiler_params=pltpu.CompilerParams(
            dimension_semantics=("parallel", "arbitrary"),
            vmem_limit_bytes=vmem_limit,
        ),
        cost_estimate=cost,
    )(x_norm, w_t_T, bias2)


# ----------------------------------------------------------------------------- reference / init
def init_params(key, in_features, out_features):
    """Deterministic re-implementation of TernaryLinear.__init__ / reset_parameters."""
    kw, kb = jax.random.split(key)
    # kaiming_uniform_(a=sqrt(5)) on (out, in): bound = sqrt(6 / ((1 + a^2) * fan_in)) = 1/sqrt(fan_in)
    fan_in = in_features
    bound = 1.0 / jnp.sqrt(fan_in)
    weight = jax.random.uniform(kw, (out_features, in_features), jnp.float32, -bound, bound)
    bias = jax.random.uniform(kb, (out_features,), jnp.float32, -bound, bound)
    # alpha = sum(weight) / (n*m) with n = m = 1  -> column-wise sum, shape (in_features,)
    alpha = jnp.sum(weight, axis=0) / (1 * 1)
    # scaling_factor = 1.0 (unused in forward)
    return weight, bias, alpha


def reference_forward(x, weight, bias, alpha):
    """Pure-JAX f32 reference mirroring the PyTorch forward exactly."""
    mean = jnp.mean(x, axis=0, keepdims=True)
    var = jnp.mean((x - mean) ** 2, axis=0, keepdims=True)
    x_norm = (x - mean) / jnp.sqrt(var + BN_EPS)
    d = weight - alpha[None, :]
    w_t = jnp.where(d > 0, 1.0, jnp.where(d < 1, -1.0, 0.0))
    pos = (w_t == 1.0).astype(jnp.float32)
    neg = (w_t == -1.0).astype(jnp.float32)
    return x_norm @ pos.T - x_norm @ neg.T + bias[None, :]


if __name__ == "__main__":
    B, IN_FEATURES, OUT_FEATURES = 8, 256, 512

    key = jax.random.PRNGKey(0)
    kx, kp = jax.random.split(key)
    x = jax.random.normal(kx, (B, IN_FEATURES), jnp.float32)
    weight, bias, alpha = init_params(kp, IN_FEATURES, OUT_FEATURES)

    # Hoisted prep: runs once per weight update, NOT once per forward call.
    w_t_T, bias2 = prepare_ternary_weights(weight, alpha, bias)
    w_t_T, bias2 = jax.block_until_ready((w_t_T, bias2))

    out = ternary_linear_forward(x, w_t_T, bias2)
    out = jax.block_until_ready(out)

    ref = reference_forward(x, weight, bias, alpha)
    # x_norm goes through the bf16 MXU path (weights in {-1,+1} are exact in bf16), so allow
    # bf16-input-rounding-level error vs the f32 reference.
    if not jnp.allclose(out, ref, atol=2e-1, rtol=2e-2):
        max_err = float(jnp.max(jnp.abs(out - ref)))
        raise AssertionError(
            f"Pallas kernel output mismatch vs JAX reference (max abs err {max_err})")

    print("KERNEL_OK")
</pallas_src>

<mosaic_0001>
module attributes {stable_mosaic.version = 11 : i64} {
  func.func @_ternary_matmul_kernel(%arg0: i32, %arg1: i32, %arg2: memref<8x256xbf16, #tpu.memory_space<vmem>>, %arg3: memref<256x512xi8, #tpu.memory_space<vmem>>, %arg4: memref<1x512xf32, #tpu.memory_space<vmem>>, %arg5: memref<8x512xf32, #tpu.memory_space<vmem>>) attributes {dimension_semantics = [#tpu.dimension_semantics<parallel>, #tpu.dimension_semantics<arbitrary>], iteration_bounds = array<i64: 1, 1>, scalar_prefetch = 0 : i64, scratch_operands = 0 : i64, tpu.core_type = #tpu.core_type<tc>, window_params = [{pipeline_mode = #tpu.pipeline_mode<synchronous>, transform_indices = @transform_0, window_bounds = array<i64: 8, 256>}, {transform_indices = @transform_1, window_bounds = array<i64: 256, 512>}, {transform_indices = @transform_2, window_bounds = array<i64: 1, 512>}, {transform_indices = @transform_3, window_bounds = array<i64: 8, 512>}]} {
    %c0_i32 = arith.constant 0 : i32
    %0 = arith.cmpi eq, %arg1, %c0_i32 : i32
    %1 = arith.extui %0 : i1 to i32
    %c0_i32_0 = arith.constant 0 : i32
    %2 = arith.cmpi ne, %1, %c0_i32_0 : i32
    scf.if %2 {
      %c0_7 = arith.constant 0 : index
      %c0_8 = arith.constant 0 : index
      %13 = vector.load %arg4[%c0_7, %c0_8] : memref<1x512xf32, #tpu.memory_space<vmem>>, vector<1x512xf32>
      %14 = vector.shape_cast %13 : vector<1x512xf32> to vector<1x512xf32>
      %15 = vector.broadcast %14 : vector<1x512xf32> to vector<8x512xf32>
      %c0_9 = arith.constant 0 : index
      %c0_10 = arith.constant 0 : index
      %16 = vector.load %arg5[%c0_9, %c0_10] : memref<8x512xf32, #tpu.memory_space<vmem>>, vector<8x512xf32>
      tpu.vector_store %arg5[%c0_9, %c0_10], %15 {strides = array<i32>} : memref<8x512xf32, #tpu.memory_space<vmem>>, vector<8x512xf32>,
    } else {
    }
    %c256_i32 = arith.constant 256 : i32
    %3 = arith.muli %arg1, %c256_i32 : i32
    %4 = tpu.assume_multiple %3, 256 : i32
    %c0 = arith.constant 0 : index
    %5 = arith.index_cast %4 : i32 to index
    %6 = vector.load %arg2[%c0, %5] : memref<8x256xbf16, #tpu.memory_space<vmem>>, vector<8x256xbf16>
    %c0_1 = arith.constant 0 : index
    %c0_2 = arith.constant 0 : index
    %7 = vector.load %arg3[%c0_1, %c0_2] : memref<256x512xi8, #tpu.memory_space<vmem>>, vector<256x512xi8>
    %8 = arith.sitofp %7 : vector<256x512xi8> to vector<256x512xbf16>
    %c0_3 = arith.constant 0 : index
    %c0_4 = arith.constant 0 : index
    %9 = vector.load %arg5[%c0_3, %c0_4] : memref<8x512xf32, #tpu.memory_space<vmem>>, vector<8x512xf32>
    %cst = arith.constant dense<0.000000e+00> : vector<8x512xf32>
    %10 = tpu.matmul %6, %8, %cst {dimension_numbers = #tpu.dot_dimension_numbers<[1], [0], [0], [1], [0, 0, 1, 1], [], []>} : vector<8x256xbf16>, vector<256x512xbf16>, vector<8x512xf32> -> vector<8x512xf32>
    %11 = arith.addf %9, %10 : vector<8x512xf32>
    %c0_5 = arith.constant 0 : index
    %c0_6 = arith.constant 0 : index
    %12 = vector.load %arg5[%c0_5, %c0_6] : memref<8x512xf32, #tpu.memory_space<vmem>>, vector<8x512xf32>
    tpu.vector_store %arg5[%c0_5, %c0_6], %11 {strides = array<i32>} : memref<8x512xf32, #tpu.memory_space<vmem>>, vector<8x512xf32>,
    return
  }
  func.func @transform_0(%arg0: i32, %arg1: i32) -> (i32, i32) {
    %c0_i32 = arith.constant 0 : i32
    %c0_i32_0 = arith.constant 0 : i32
    %c0_i32_1 = arith.constant 0 : i32
    return %c0_i32, %c0_i32_0 : i32, i32
  }
  func.func @transform_1(%arg0: i32, %arg1: i32) -> (i32, i32) {
    %c0_i32 = arith.constant 0 : i32
    return %arg1, %arg0 : i32, i32
  }
  func.func @transform_2(%arg0: i32, %arg1: i32) -> (i32, i32) {
    %c0_i32 = arith.constant 0 : i32
    %c0_i32_0 = arith.constant 0 : i32
    return %c0_i32, %arg0 : i32, i32
  }
  func.func @transform_3(%arg0: i32, %arg1: i32) -> (i32, i32) {
    %c0_i32 = arith.constant 0 : i32
    %c0_i32_0 = arith.constant 0 : i32
    return %c0_i32, %arg0 : i32, i32
  }
}

</mosaic_0001>

<llo_original>
// kernel: tpu_custom_call.1
$region0: #{tpu_custom_call.1}
  #allocation0 [shape = 'u32[]', space=smem, size = 0x4, offset = 0x4, fixed_abs, tag = 'smem constant byte address 0x4 - core index']
  #allocation1 [shape = 'u32[144,128]{1,0:T(1,128)}', space=vmem, size = 0x12000, scoped, tag = 'internal scratch']
  %s0 = inlined_call_operand.hbm [shape: bf16[8,256], index: 0, kind: input, shape index: {}]
  %s1 = inlined_call_operand.hbm [shape: s8[256,512], index: 1, kind: input, shape index: {}]
  %s2 = inlined_call_operand.vmem [shape: f32[1,512], index: 2, kind: input, shape index: {}]
  %s3 = inlined_call_operand.hbm [shape: f32[8,512], index: 3, kind: output, shape index: {}]
  %s4 = sld [smem:[#allocation0]]
  $region34: #{tpu_custom_call.1} parent=0
    _
  %s6 = ssub.s32 1, %s4
  %s7 = scalar_select 0, %s6, %s4
  $region1: #{tpu_custom_call.1} parent=0
    #allocation2 [shape = 'u8[4096]{0}', space=vmem, size = 0x1000, scoped, tag = 'input window, operand 0, single buffered']
    #allocation3 [shape = 's32[1]{0}', space=sflag, size = 0x4, scoped, tag = 'scoped memory for tpu_custom_call.1']
    #allocation4 [shape = 's32[1]{0}', space=sflag, size = 0x4, scoped, tag = 'scoped memory for tpu_custom_call.1']
    #allocation5 [shape = 'u8[131072]{0}', space=vmem, size = 0x20000, scoped, tag = 'input window, operand 1, single buffered']
    #allocation6 [shape = 's32[1]{0}', space=sflag, size = 0x4, scoped, tag = 'scoped memory for tpu_custom_call.1']
    #allocation7 [shape = 'u8[16384]{0}', space=vmem, size = 0x4000, scoped, tag = 'output window, operand 0, single buffered']
    %8 = vsyncpa [#allocation3], 0
    %9 = vsyncpa [#allocation6], 0
    %10 = vsyncpa [#allocation4], 0
    // Predicated region
    $region2: #{tpu_custom_call.1} parent=1 // pred_check
      _
    $region3: #{tpu_custom_call.1} parent=1 // pred_check_branch
      %12 = sbr.rel (0) target = $region5
    $region4: #{tpu_custom_call.1} parent=1 // pred_region
      %s14 = ssub.s32 128, 128
      %15 = vsyncadd [#allocation3], %s14
      %s17 = sshll.u32 [#allocation2], 4
      %s18 = int_to_ptr.vmem [resolvable:$true] %s17
      %20 = dma.hbm_to_vmem [thread:$0]  %s0, 128, %s18, [#allocation3]
    $region5: #{tpu_custom_call.1} parent=1 // pred_fallthru
      _
    // Predicated region
    $region6: #{tpu_custom_call.1} parent=1 // pred_check
      _
    $region7: #{tpu_custom_call.1} parent=1 // pred_check_branch
      %22 = sbr.rel (0) target = $region9
    $region8: #{tpu_custom_call.1} parent=1 // pred_region
      %s24 = ssub.s32 4096, 4096
      %25 = vsyncadd [#allocation6], %s24
      %s26 = sshll.u32 [#allocation5], 4
      %s27 = int_to_ptr.vmem [resolvable:$true] %s26
      %32 = dma.hbm_to_vmem [thread:$0]  %s1, 4096, %s27, [#allocation6], 512, 512, 32
    $region9: #{tpu_custom_call.1} parent=1 // pred_fallthru
      _
    // Predicated region
    $region10: #{tpu_custom_call.1} parent=1 // pred_check
      _
    $region11: #{tpu_custom_call.1} parent=1 // pred_check_branch
      %34 = sbr.rel (0) target = $region13
    $region12: #{tpu_custom_call.1} parent=1 // pred_region
      _
    $region13: #{tpu_custom_call.1} parent=1 // pred_fallthru
      _
    // Predicated region
    $region14: #{tpu_custom_call.1} parent=1 // pred_check
      _
    $region15: #{tpu_custom_call.1} parent=1 // pred_check_branch
      %36 = sbr.rel (0) target = $region17
    $region16: #{tpu_custom_call.1} parent=1 // pred_region
      %37 = dma.done [#allocation3], 128
    $region17: #{tpu_custom_call.1} parent=1 // pred_fallthru
      _
    // Predicated region
    $region18: #{tpu_custom_call.1} parent=1 // pred_check
      _
    $region19: #{tpu_custom_call.1} parent=1 // pred_check_branch
      %39 = sbr.rel (0) target = $region21
    $region20: #{tpu_custom_call.1} parent=1 // pred_region
      %40 = dma.done [#allocation6], 4096
    $region21: #{tpu_custom_call.1} parent=1 // pred_fallthru
      _
    %p41 = scmp.eq.s32.totalorder 0, 0
    // Predicated region
    $region22: #{tpu_custom_call.1} parent=1 // pred_check
      %p42 = pneg %p41
    $region23: #{tpu_custom_call.1} parent=1 // pred_check_branch
      %44 = sbr.rel (%p42) target = $region25
    $region24: #{tpu_custom_call.1} parent=1 // pred_region
      %v45 = vld [vmem:[%s2] sm:$0xf]
      %v47 = vlaneseq
      %v48 = vshrl.u32 %v47, 7
      %v49 = vsub.s32 0, %v48
      %v50 = vrot.slane %v45, %v49
      %v51 = vlaneseq
      %v52 = vshrl.u32 %v51, 7
      %v53 = vsub.s32 1, %v52
      %v54 = vrot.slane %v45, %v53
      %v55 = vlaneseq
      %v56 = vshrl.u32 %v55, 7
      %v57 = vsub.s32 2, %v56
      %v58 = vrot.slane %v45, %v57
      %v59 = vlaneseq
      %v60 = vshrl.u32 %v59, 7
      %v61 = vsub.s32 3, %v60
      %v62 = vrot.slane %v45, %v61
      %67 = vst [vmem:[#allocation7] sm:$0xff] %v50
      %68 = vst [vmem:[#allocation7 + $0x8] sm:$0xff] %v54
      %69 = vst [vmem:[#allocation7 + $0x10] sm:$0xff] %v58
      %70 = vst [vmem:[#allocation7 + $0x18] sm:$0xff] %v62
    $region25: #{tpu_custom_call.1} parent=1 // pred_fallthru
      _
    %s71 = smul.u32 0, 256
    %s72 = sshra.s32 %s71, 7
    %s73 = sand.u32 %s71, 127
    %s74 = smul.addr %s72, 4
    %s75 = scalar_lea.vmem [#allocation2], %s74
    %v76 = vld [vmem:[%s75] sm:$0xff]
    %v77 = vld [vmem:[#allocation5] sm:$0xff]
    %v78 = vld [vmem:[#allocation5 + $0x8] sm:$0xff]
    %v79 = vld [vmem:[#allocation5 + $0x10] sm:$0xff]
    %v80 = vld [vmem:[#allocation5 + $0x18] sm:$0xff]
    %v81 = vld [vmem:[#allocation5 + $0x20] sm:$0xff]
    %v82 = vld [vmem:[#allocation5 + $0x28] sm:$0xff]
    %v83 = vld [vmem:[#allocation5 + $0x30] sm:$0xff]
    %v84 = vld [vmem:[#allocation5 + $0x38] sm:$0xff]
    %v85 = vld [vmem:[#allocation5 + $0x40] sm:$0xff]
    %v86 = vld [vmem:[#allocation5 + $0x48] sm:$0xff]
    %v87 = vld [vmem:[#allocation5 + $0x50] sm:$0xff]
    %v88 = vld [vmem:[#allocation5 + $0x58] sm:$0xff]
    %v89 = vld [vmem:[#allocation5 + $0x60] sm:$0xff]
    %v90 = vld [vmem:[#allocation5 + $0x68] sm:$0xff]
    %v91 = vld [vmem:[#allocation5 + $0x70] sm:$0xff]
    %v92 = vld [vmem:[#allocation5 + $0x78] sm:$0xff]
    %v93 = vld [vmem:[#allocation5 + $0x80] sm:$0xff]
    %v94 = vld [vmem:[#allocation5 + $0x88] sm:$0xff]
    %v95 = vld [vmem:[#allocation5 + $0x90] sm:$0xff]
    %v96 = vld [vmem:[#allocation5 + $0x98] sm:$0xff]
    %v97 = vld [vmem:[#allocation5 + $0xa0] sm:$0xff]
    %v98 = vld [vmem:[#allocation5 + $0xa8] sm:$0xff]
    %v99 = vld [vmem:[#allocation5 + $0xb0] sm:$0xff]
    %v100 = vld [vmem:[#allocation5 + $0xb8] sm:$0xff]
    %v101 = vld [vmem:[#allocation5 + $0xc0] sm:$0xff]
    %v102 = vld [vmem:[#allocation5 + $0xc8] sm:$0xff]
    %v103 = vld [vmem:[#allocation5 + $0xd0] sm:$0xff]
    %v104 = vld [vmem:[#allocation5 + $0xd8] sm:$0xff]
    %v105 = vld [vmem:[#allocation5 + $0xe0] sm:$0xff]
    %v106 = vld [vmem:[#allocation5 + $0xe8] sm:$0xff]
    %v107 = vld [vmem:[#allocation5 + $0xf0] sm:$0xff]
    %v108 = vld [vmem:[#allocation5 + $0xf8] sm:$0xff]
    %v109 = vunpack.c.l.s8.bf16 %v77
    %v110 = vunpack.c.l.s8.bf16 %v78
    %v111 = vunpack.c.l.s8.bf16 %v79
    %v112 = vunpack.c.l.s8.bf16 %v80
    %v113 = vunpack.c.h.s8.bf16 %v77
    %v114 = vunpack.c.h.s8.bf16 %v78
    %v115 = vunpack.c.h.s8.bf16 %v79
    %v116 = vunpack.c.h.s8.bf16 %v80
    %v117 = vunpack.c.l.s8.bf16 %v81
    %v118 = vunpack.c.l.s8.bf16 %v82
    %v119 = vunpack.c.l.s8.bf16 %v83
    %v120 = vunpack.c.l.s8.bf16 %v84
    %v121 = vunpack.c.h.s8.bf16 %v81
    %v122 = vunpack.c.h.s8.bf16 %v82
    %v123 = vunpack.c.h.s8.bf16 %v83
    %v124 = vunpack.c.h.s8.bf16 %v84
    %v125 = vunpack.c.l.s8.bf16 %v85
    %v126 = vunpack.c.l.s8.bf16 %v86
    %v127 = vunpack.c.l.s8.bf16 %v87
    %v128 = vunpack.c.l.s8.bf16 %v88
    %v129 = vunpack.c.h.s8.bf16 %v85
    %v130 = vunpack.c.h.s8.bf16 %v86
    %v131 = vunpack.c.h.s8.bf16 %v87
    %v132 = vunpack.c.h.s8.bf16 %v88
    %v133 = vunpack.c.l.s8.bf16 %v89
    %v134 = vunpack.c.l.s8.bf16 %v90
    %v135 = vunpack.c.l.s8.bf16 %v91
    %v136 = vunpack.c.l.s8.bf16 %v92
    %v137 = vunpack.c.h.s8.bf16 %v89
    %v138 = vunpack.c.h.s8.bf16 %v90
    %v139 = vunpack.c.h.s8.bf16 %v91
    %v140 = vunpack.c.h.s8.bf16 %v92
    %v141 = vunpack.c.l.s8.bf16 %v93
    %v142 = vunpack.c.l.s8.bf16 %v94
    %v143 = vunpack.c.l.s8.bf16 %v95
    %v144 = vunpack.c.l.s8.bf16 %v96
    %v145 = vunpack.c.h.s8.bf16 %v93
    %v146 = vunpack.c.h.s8.bf16 %v94
    %v147 = vunpack.c.h.s8.bf16 %v95
    %v148 = vunpack.c.h.s8.bf16 %v96
    %v149 = vunpack.c.l.s8.bf16 %v97
    %v150 = vunpack.c.l.s8.bf16 %v98
    %v151 = vunpack.c.l.s8.bf16 %v99
    %v152 = vunpack.c.l.s8.bf16 %v100
    %v153 = vunpack.c.h.s8.bf16 %v97
    %v154 = vunpack.c.h.s8.bf16 %v98
    %v155 = vunpack.c.h.s8.bf16 %v99
    %v156 = vunpack.c.h.s8.bf16 %v100
    %v157 = vunpack.c.l.s8.bf16 %v101
    %v158 = vunpack.c.l.s8.bf16 %v102
    %v159 = vunpack.c.l.s8.bf16 %v103
    %v160 = vunpack.c.l.s8.bf16 %v104
    %v161 = vunpack.c.h.s8.bf16 %v101
    %v162 = vunpack.c.h.s8.bf16 %v102
    %v163 = vunpack.c.h.s8.bf16 %v103
    %v164 = vunpack.c.h.s8.bf16 %v104
    %v165 = vunpack.c.l.s8.bf16 %v105
    %v166 = vunpack.c.l.s8.bf16 %v106
    %v167 = vunpack.c.l.s8.bf16 %v107
    %v168 = vunpack.c.l.s8.bf16 %v108
    %v169 = vunpack.c.h.s8.bf16 %v105
    %v170 = vunpack.c.h.s8.bf16 %v106
    %v171 = vunpack.c.h.s8.bf16 %v107
    %v172 = vunpack.c.h.s8.bf16 %v108
    %v173 = vld [vmem:[#allocation7] sm:$0xff]
    %v174 = vld [vmem:[#allocation7 + $0x8] sm:$0xff]
    %v175 = vld [vmem:[#allocation7 + $0x10] sm:$0xff]
    %v176 = vld [vmem:[#allocation7 + $0x18] sm:$0xff]
    %v178 = vunpack.c.l.b16 %v76
    %v179 = vunpack.c.h.b16 %v76
    %v180 = vpack.c.b16 %v178, %v178
    %v181 = vpack.c.b16 %v179, %v179
    %184 = vmatprep.subr.bf16.mxu0 %v110
    %185 = vmatpush1.bf16.msra.mxu0 %v109
    %186 = vmatprep.subr.bf16.mxu0 %v114
    %187 = vmatpush1.bf16.msra.mxu0 %v113
    %188 = vmatprep.subr.bf16.mxu0 %v118
    %189 = vmatpush1.bf16.msra.mxu0 %v117
    %190 = vmatprep.subr.bf16.mxu0 %v122
    %191 = vmatpush1.bf16.msra.mxu0 %v121
    %192 = vmatprep.subr.bf16.mxu0 %v126
    %193 = vmatpush1.bf16.msra.mxu0 %v125
    %194 = vmatprep.subr.bf16.mxu0 %v130
    %195 = vmatpush1.bf16.msra.mxu0 %v129
    %196 = vmatprep.subr.bf16.mxu0 %v134
    %197 = vmatpush1.bf16.msra.mxu0 %v133
    %198 = vmatprep.subr.bf16.mxu0 %v138
    %199 = vmatpush1.bf16.msra.mxu0 %v137
    %200 = vmatprep.subr.bf16.mxu0 %v142
    %201 = vmatpush1.bf16.msra.mxu0 %v141
    %202 = vmatprep.subr.bf16.mxu0 %v146
    %203 = vmatpush1.bf16.msra.mxu0 %v145
    %204 = vmatprep.subr.bf16.mxu0 %v150
    %205 = vmatpush1.bf16.msra.mxu0 %v149
    %206 = vmatprep.subr.bf16.mxu0 %v154
    %207 = vmatpush1.bf16.msra.mxu0 %v153
    %208 = vmatprep.subr.bf16.mxu0 %v158
    %209 = vmatpush1.bf16.msra.mxu0 %v157
    %210 = vmatprep.subr.bf16.mxu0 %v162
    %211 = vmatpush1.bf16.msra.mxu0 %v161
    %212 = vmatprep.subr.bf16.mxu0 %v166
    %213 = vmatpush1.bf16.msra.mxu0 %v165
    %214 = vmatprep.subr.bf16.mxu0 %v170
    %215 = vmatpush1.bf16.msra.mxu0 %v169
    %216 = vmatprep.mubr.bf16.mxu0 %v181
    %217 = vmatmul.mubr.bf16.gmra.mrb[0].mxu0 %v180
    %v218 = vpop.f32.mrb[0].mxu0
    %v219 = vadd.f32 0.0, %v218
    %v220 = vpop.f32.mrb[0].mxu0
    %v221 = vadd.f32 0.0, %v220
    %v222 = vpop.f32.mrb[0].mxu0
    %v223 = vpop.f32.mrb[0].mxu0
    %224 = vdwg.mxu0
    %225 = vmatprep.subr.bf16.mxu0 %v112
    %226 = vmatpush1.bf16.msra.mxu0 %v111
    %227 = vmatprep.subr.bf16.mxu0 %v116
    %228 = vmatpush1.bf16.msra.mxu0 %v115
    %229 = vmatprep.subr.bf16.mxu0 %v120
    %230 = vmatpush1.bf16.msra.mxu0 %v119
    %231 = vmatprep.subr.bf16.mxu0 %v124
    %232 = vmatpush1.bf16.msra.mxu0 %v123
    %233 = vmatprep.subr.bf16.mxu0 %v128
    %234 = vmatpush1.bf16.msra.mxu0 %v127
    %235 = vmatprep.subr.bf16.mxu0 %v132
    %236 = vmatpush1.bf16.msra.mxu0 %v131
    %237 = vmatprep.subr.bf16.mxu0 %v136
    %238 = vmatpush1.bf16.msra.mxu0 %v135
    %239 = vmatprep.subr.bf16.mxu0 %v140
    %240 = vmatpush1.bf16.msra.mxu0 %v139
    %241 = vmatprep.subr.bf16.mxu0 %v144
    %242 = vmatpush1.bf16.msra.mxu0 %v143
    %243 = vmatprep.subr.bf16.mxu0 %v148
    %244 = vmatpush1.bf16.msra.mxu0 %v147
    %245 = vmatprep.subr.bf16.mxu0 %v152
    %246 = vmatpush1.bf16.msra.mxu0 %v151
    %247 = vmatprep.subr.bf16.mxu0 %v156
    %248 = vmatpush1.bf16.msra.mxu0 %v155
    %249 = vmatprep.subr.bf16.mxu0 %v160
    %250 = vmatpush1.bf16.msra.mxu0 %v159
    %251 = vmatprep.subr.bf16.mxu0 %v164
    %252 = vmatpush1.bf16.msra.mxu0 %v163
    %253 = vmatprep.subr.bf16.mxu0 %v168
    %254 = vmatpush1.bf16.msra.mxu0 %v167
    %255 = vmatprep.subr.bf16.mxu0 %v172
    %256 = vmatpush1.bf16.msra.mxu0 %v171
    %257 = vmatprep.mubr.bf16.mxu0 %v181
    %258 = vmatmul.mubr.bf16.gmra.mrb[0].mxu0 %v180
    %v259 = vpop.f32.mrb[0].mxu0
    %v260 = vadd.f32 0.0, %v259
    %v261 = vpop.f32.mrb[0].mxu0
    %v262 = vadd.f32 0.0, %v261
    %v263 = vpop.f32.mrb[0].mxu0
    %v264 = vpop.f32.mrb[0].mxu0
    %265 = vdwg.mxu0
    %v266 = vadd.f32 %v173, %v219
    %v267 = vadd.f32 %v174, %v221
    %v268 = vadd.f32 %v175, %v260
    %v269 = vadd.f32 %v176, %v262
    %270 = vst [vmem:[#allocation7] sm:$0xff] %v266
    %271 = vst [vmem:[#allocation7 + $0x8] sm:$0xff] %v267
    %272 = vst [vmem:[#allocation7 + $0x10] sm:$0xff] %v268
    %273 = vst [vmem:[#allocation7 + $0x18] sm:$0xff] %v269
    // Predicated region
    $region26: #{tpu_custom_call.1} parent=1 // pred_check
      _
    $region27: #{tpu_custom_call.1} parent=1 // pred_check_branch
      %275 = sbr.rel (0) target = $region29
    $region28: #{tpu_custom_call.1} parent=1 // pred_region
      %s277 = ssub.s32 512, 512
      %278 = vsyncadd [#allocation4], %s277
      %s280 = sshll.u32 [#allocation7], 4
      %s281 = int_to_ptr.vmem [resolvable:$true] %s280
      %283 = dma.vmem_to_hbm [thread:$0]  %s281, 512, %s3, [#allocation4]
    $region29: #{tpu_custom_call.1} parent=1 // pred_fallthru
      _
    // Predicated region
    $region30: #{tpu_custom_call.1} parent=1 // pred_check
      _
    $region31: #{tpu_custom_call.1} parent=1 // pred_check_branch
      %285 = sbr.rel (0) target = $region33
    $region32: #{tpu_custom_call.1} parent=1 // pred_region
      %286 = dma.done [#allocation4], 512
    $region33: #{tpu_custom_call.1} parent=1 // pred_fallthru
      _
    %287 = vsyncpa [#allocation3], 1
    %288 = vsyncpa [#allocation6], 1
    %289 = vsyncpa [#allocation4], 1

</llo_original>
